<compile_context>
chip_gen: v7x
topology: tpu7x:2x2x1
jax: 0.10.0
libtpu: 0.0.40
codegen_flags: <defaults>
</compile_context>

<pallas_src>
import functools

import jax
import jax.numpy as jnp
from jax import lax
from jax.experimental import pallas as pl
from jax.experimental.pallas import tpu as pltpu

_LANE = 128        # vreg lane width  -> pad C_out so output stores are unmasked
_ROW_TILE = 16     # bf16 sublane tile -> keeps row offsets / tiles tile-aligned


def _round_up(x, m):
    return ((x + m - 1) // m) * m


# ----------------------------------------------------------------------------
# Pallas kernel: (row-tile x K) matmul(s) + fused BN shift + ReLU
# ----------------------------------------------------------------------------
def _conv_bn_act_kernel(x_ref, w_ref, shift_ref, o_ref, *, tap_offsets, tm):
    # x_ref:     (1, 1, R_blk, Kx)   bf16  activation rows for this (image, tile)
    # w_ref:     (K_tot, Cp)  or (n_taps, Kx, Cp)   bf16, BN scale folded in
    # shift_ref: (1, Cp)             f32   fused BN shift (zeros in padded cols)
    # o_ref:     (1, 1, tm, Cp)      f32   output rows (lane-dense, unmasked vst)
    # tap_offsets: static row offsets (multiples of 16 -> tile-aligned slices).
    if len(tap_offsets) == 1:
        off = tap_offsets[0]
        acc = jnp.dot(x_ref[0, 0, off:off + tm, :], w_ref[...],
                      preferred_element_type=jnp.float32)       # single full-K matmul
    else:
        # per-tap matmuls (K = kw*C_in >= 256 here), accumulated in a local value
        # (no VMEM scratch round-trip between taps).
        acc = None
        for i, off in enumerate(tap_offsets):
            c = jnp.dot(x_ref[0, 0, off:off + tm, :], w_ref[i],
                        preferred_element_type=jnp.float32)
            acc = c if acc is None else acc + c
    y = acc + shift_ref[...]                                     # BN shift (scale in w)
    o_ref[0, 0, :, :] = jnp.maximum(y, 0.0).astype(o_ref.dtype)  # ReLU, unmasked store


def _choose_row_tile(rows, halo, kx, k_tot, cp):
    """Largest 16-multiple row tile whose per-step VMEM working set fits a ~10 MiB
    budget (safe under v5e's 16 MiB default scoped VMEM and v7x's 64 MiB physical)."""
    full = _round_up(rows, _ROW_TILE)
    budget = 10 << 20

    def need(tm):
        x_blk = 2 * (tm + halo) * kx * 2     # bf16 activation block, double-buffered
        out_blk = 2 * tm * cp * 4            # f32 output block, double-buffered
        w_b = 2 * k_tot * cp * 2             # bf16 weights (conservatively 2x)
        acc = tm * cp * 4                    # f32 accumulator value
        return x_blk + out_blk + w_b + acc

    cands = ([full] if full <= 1024 else []) + \
            [t for t in (1024, 512, 256, 128, 64, 32, 16) if t < full]
    seen = set()
    cands = [t for t in cands if not (t in seen or seen.add(t))]
    for tm in cands:
        if need(tm) <= budget:
            return tm, need(tm)
    return _ROW_TILE, need(_ROW_TILE)


def _fused_conv_bn_relu(x_tiles, w, shift_row, *, tap_offsets, tm, vmem_limit):
    N, T, R_blk, Kx = x_tiles.shape
    Cp = shift_row.shape[-1]
    K_tot = w.shape[-2] if w.ndim == 2 else w.shape[0] * w.shape[1]

    kernel = functools.partial(_conv_bn_act_kernel, tap_offsets=tap_offsets, tm=tm)
    w_index = (lambda n, t: (0, 0)) if w.ndim == 2 else (lambda n, t: (0, 0, 0))

    flops = 2 * N * T * tm * K_tot * Cp
    bytes_accessed = (x_tiles.size * 2 + w.size * 2 + shift_row.size * 4
                      + N * T * tm * Cp * 4)

    return pl.pallas_call(
        kernel,
        out_shape=jax.ShapeDtypeStruct((N, T, tm, Cp), jnp.float32),
        grid_spec=pltpu.PrefetchScalarGridSpec(
            num_scalar_prefetch=0,
            grid=(N, T),                                    # images x row tiles
            in_specs=[
                pl.BlockSpec((1, 1, R_blk, Kx), lambda n, t: (n, t, 0, 0)),
                pl.BlockSpec(w.shape, w_index),             # resident folded weights
                pl.BlockSpec((1, Cp), lambda n, t: (0, 0)),
            ],
            out_specs=pl.BlockSpec((1, 1, tm, Cp), lambda n, t: (n, t, 0, 0)),
        ),
        compiler_params=pltpu.CompilerParams(
            dimension_semantics=("parallel", "parallel"),   # disjoint outputs -> both parallel
            vmem_limit_bytes=vmem_limit,
        ),
        cost_estimate=pl.CostEstimate(
            flops=int(flops), transcendentals=0, bytes_accessed=int(bytes_accessed)),
    )(x_tiles, w, shift_row)


# ----------------------------------------------------------------------------
# Wrapper: Conv2dBNAct forward (NCHW in, NCHW out)
# ----------------------------------------------------------------------------
@functools.partial(jax.jit, static_argnames=("stride", "padding", "dilation"))
def conv2d_bn_act(x_nchw, weight_oihw, bn_gamma, bn_beta, bn_mean, bn_var,
                  conv_bias=None, *, stride=1, padding=1, dilation=1, eps=1e-5):
    # TODO(synk): groups > 1, non-'zeros' padding_mode and norms/activations other
    # than eval-mode BatchNorm2d + ReLU are not implemented in this kernel.
    N, C_in, H, W = x_nchw.shape
    C_out, C_in_w, kh, kw = weight_oihw.shape
    if C_in_w != C_in:
        raise ValueError("groups != 1 is not supported")
    s, d, p = stride, dilation, padding

    H_out = (H + 2 * p - d * (kh - 1) - 1) // s + 1
    W_out = (W + 2 * p - d * (kw - 1) - 1) // s + 1
    Cp = _round_up(C_out, _LANE)                    # lane-dense output channels

    # ---- fold eval-mode BatchNorm (+ optional conv bias) into scale / shift ----
    scale = bn_gamma * lax.rsqrt(bn_var + eps)                     # (C_out,)
    shift = bn_beta - bn_mean * scale
    if conv_bias is not None:
        shift = shift + conv_bias * scale
    w_hwio = jnp.transpose(weight_oihw * scale[:, None, None, None],
                           (2, 3, 1, 0))                           # (kh,kw,C_in,C_out)
    w_hwio = jnp.pad(w_hwio, ((0, 0), (0, 0), (0, 0), (0, Cp - C_out)))
    w_hwio = w_hwio.astype(jnp.bfloat16)
    shift_row = jnp.pad(shift, (0, Cp - C_out)).reshape(1, Cp).astype(jnp.float32)

    # ---- activations: NCHW -> NHWC, cast bf16 BEFORE any pad / slab duplication ---
    x_nhwc = jnp.transpose(x_nchw, (0, 2, 3, 1)).astype(jnp.bfloat16)

    # Small K (kw*C_in < 256) underfills the 256-deep MXU when split per tap, so use
    # full im2col and a single K = kh*kw*C_in matmul; same path handles stride != 1.
    use_im2col = (s != 1) or (kw * C_in < 256)

    if use_im2col:
        x_pad = jnp.pad(x_nhwc, ((0, 0), (p, p), (p, p), (0, 0)))
        slabs = []
        for ki in range(kh):
            for kj in range(kw):
                slabs.append(lax.slice(
                    x_pad,
                    (0, ki * d, kj * d, 0),
                    (N, ki * d + (H_out - 1) * s + 1,
                     kj * d + (W_out - 1) * s + 1, C_in),
                    (1, s, s, 1)))                      # (N, H_out, W_out, C_in)
        K_tot = kh * kw * C_in
        rows = H_out * W_out                            # only total rows get padded
        x_rows = jnp.concatenate(slabs, axis=-1).reshape(N, rows, K_tot)
        w = w_hwio.reshape(K_tot, Cp)                   # rows = (ki*kw + kj)*C_in + ci
        halo, Kx = 0, K_tot
        tm, need = _choose_row_tile(rows, halo, Kx, K_tot, Cp)
        T = pl.cdiv(rows, tm)
        x_rows = jnp.pad(x_rows, ((0, 0), (0, T * tm - rows), (0, 0)))
        x_tiles = x_rows.reshape(N, T, tm, K_tot)
        tap_offsets = (0,)
        W_row = W_out
    else:
        # stride-1, large-K path: only kw W-shifted slabs in HBM (kw x duplication),
        # kh tap matmuls (K = kw*C_in >= 256) accumulated in-kernel.
        W_out_p = _round_up(W_out, _ROW_TILE)
        x_pad = jnp.pad(x_nhwc, ((0, 0), (p, p), (p, p + (W_out_p - W_out)), (0, 0)))
        H_pad = H + 2 * p
        slabs = [x_pad[:, :, kj * d: kj * d + W_out_p, :] for kj in range(kw)]
        Kx = kw * C_in                                  # lane index = kj*C_in + ci
        x_slab = jnp.concatenate(slabs, axis=-1).reshape(N, H_pad * W_out_p, Kx)
        w = w_hwio.reshape(kh, Kx, Cp)
        K_tot = kh * Kx
        halo = (kh - 1) * d * W_out_p
        rows = H_out * W_out_p
        tm, need = _choose_row_tile(rows, halo, Kx, K_tot, Cp)
        T = pl.cdiv(rows, tm)
        pad_rows = T * tm + halo - x_slab.shape[1]
        if pad_rows > 0:
            x_slab = jnp.pad(x_slab, ((0, 0), (0, pad_rows), (0, 0)))
        R_blk = tm + halo
        # overlapping row tiles (halo duplicated only when T > 1, a small fraction)
        x_tiles = jnp.stack(
            [lax.slice_in_dim(x_slab, t * tm, t * tm + R_blk, axis=1)
             for t in range(T)], axis=1)                # (N, T, R_blk, Kx)
        tap_offsets = tuple(ki * d * W_out_p for ki in range(kh))
        W_row = W_out_p

    vmem_limit = int(min(max(2 * need, 32 << 20), 48 << 20))
    out = _fused_conv_bn_relu(x_tiles, w, shift_row,
                              tap_offsets=tap_offsets, tm=tm, vmem_limit=vmem_limit)

    # (N, T, tm, Cp) -> drop row/channel padding -> NHWC -> NCHW
    out = out.reshape(N, T * tm, Cp)[:, :rows, :]
    out = out.reshape(N, H_out, W_row, Cp)[:, :, :W_out, :C_out]
    return jnp.transpose(out, (0, 3, 1, 2))


# ----------------------------------------------------------------------------
# Pure-JAX reference (for correctness check)
# ----------------------------------------------------------------------------
def _reference(x_nchw, weight_oihw, bn_gamma, bn_beta, bn_mean, bn_var,
               stride=1, padding=1, dilation=1, eps=1e-5):
    y = lax.conv_general_dilated(
        x_nchw, weight_oihw,
        window_strides=(stride, stride),
        padding=((padding, padding), (padding, padding)),
        rhs_dilation=(dilation, dilation),
        dimension_numbers=("NCHW", "OIHW", "NCHW"),
    )
    scale = (bn_gamma / jnp.sqrt(bn_var + eps)).reshape(1, -1, 1, 1)
    shift = (bn_beta - bn_mean * bn_gamma / jnp.sqrt(bn_var + eps)).reshape(1, -1, 1, 1)
    return jnp.maximum(y * scale + shift, 0.0)


if __name__ == "__main__":
    key = jax.random.PRNGKey(0)

    def make_case(k, N, C_in, H, W, C_out, kh, kw):
        ks = jax.random.split(k, 6)
        x = jax.random.normal(ks[0], (N, C_in, H, W), dtype=jnp.float32)
        w = jax.random.normal(ks[1], (C_out, C_in, kh, kw), dtype=jnp.float32) * 0.1
        g = 1.0 + 0.1 * jax.random.normal(ks[2], (C_out,), dtype=jnp.float32)
        b = 0.1 * jax.random.normal(ks[3], (C_out,), dtype=jnp.float32)
        m = 0.1 * jax.random.normal(ks[4], (C_out,), dtype=jnp.float32)
        v = 1.0 + 0.1 * jnp.abs(jax.random.normal(ks[5], (C_out,), dtype=jnp.float32))
        return x, w, g, b, m, v

    k1, k2 = jax.random.split(key)

    # Case 1: matches the dynamic_routing usage (3x3, stride 1, pad 1, dilation 1,
    # groups 1, bias=False, eval BatchNorm2d, ReLU) -> small-K single-matmul path.
    x, w, g, b, m, v = make_case(k1, 2, 4, 16, 16, 8, 3, 3)
    out = conv2d_bn_act(x, w, g, b, m, v, stride=1, padding=1)
    out = jax.block_until_ready(out)
    ref = _reference(x, w, g, b, m, v, stride=1, padding=1)
    assert out.shape == (2, 8, 16, 16)
    # bf16 operands -> loosened tolerance vs. the f32 reference.
    assert jnp.allclose(out, ref, atol=5e-2, rtol=5e-2), "case1 mismatch vs reference"

    # Case 2: larger C_in (kw*C_in >= 256) -> exercises the kw-slab multi-tap path.
    x, w, g, b, m, v = make_case(k2, 2, 96, 12, 12, 16, 3, 3)
    out = conv2d_bn_act(x, w, g, b, m, v, stride=1, padding=1)
    out = jax.block_until_ready(out)
    ref = _reference(x, w, g, b, m, v, stride=1, padding=1)
    assert out.shape == (2, 16, 12, 12)
    assert jnp.allclose(out, ref, atol=5e-2, rtol=5e-2), "case2 mismatch vs reference"

    print("KERNEL_OK")
</pallas_src>

<mosaic_0001>
module attributes {stable_mosaic.version = 11 : i64} {
  func.func @_conv_bn_act_kernel(%arg0: i32, %arg1: i32, %arg2: memref<1x1x256x36xbf16, #tpu.memory_space<vmem>>, %arg3: memref<36x128xbf16, #tpu.memory_space<vmem>>, %arg4: memref<1x128xf32, #tpu.memory_space<vmem>>, %arg5: memref<1x1x256x128xf32, #tpu.memory_space<vmem>>) attributes {dimension_semantics = [#tpu.dimension_semantics<parallel>, #tpu.dimension_semantics<parallel>], iteration_bounds = array<i64: 2, 1>, scalar_prefetch = 0 : i64, scratch_operands = 0 : i64, tpu.core_type = #tpu.core_type<tc>, window_params = [{transform_indices = @transform_0, window_bounds = array<i64: 1, 1, 256, 36>}, {pipeline_mode = #tpu.pipeline_mode<synchronous>, transform_indices = @transform_1, window_bounds = array<i64: 36, 128>}, {pipeline_mode = #tpu.pipeline_mode<synchronous>, transform_indices = @transform_2, window_bounds = array<i64: 1, 128>}, {transform_indices = @transform_3, window_bounds = array<i64: 1, 1, 256, 128>}]} {
    %c0 = arith.constant 0 : index
    %c0_0 = arith.constant 0 : index
    %c0_1 = arith.constant 0 : index
    %c0_2 = arith.constant 0 : index
    %0 = vector.load %arg2[%c0, %c0_0, %c0_1, %c0_2] : memref<1x1x256x36xbf16, #tpu.memory_space<vmem>>, vector<1x1x256x36xbf16>
    %1 = vector.shape_cast %0 : vector<1x1x256x36xbf16> to vector<256x36xbf16>
    %c0_3 = arith.constant 0 : index
    %c0_4 = arith.constant 0 : index
    %2 = vector.load %arg3[%c0_3, %c0_4] : memref<36x128xbf16, #tpu.memory_space<vmem>>, vector<36x128xbf16>
    %cst = arith.constant dense<0.000000e+00> : vector<256x128xf32>
    %3 = tpu.matmul %1, %2, %cst {dimension_numbers = #tpu.dot_dimension_numbers<[1], [0], [0], [1], [0, 0, 1, 1], [], []>} : vector<256x36xbf16>, vector<36x128xbf16>, vector<256x128xf32> -> vector<256x128xf32>
    %c0_5 = arith.constant 0 : index
    %c0_6 = arith.constant 0 : index
    %4 = vector.load %arg4[%c0_5, %c0_6] : memref<1x128xf32, #tpu.memory_space<vmem>>, vector<1x128xf32>
    %5 = vector.broadcast %4 : vector<1x128xf32> to vector<256x128xf32>
    %6 = arith.addf %3, %5 : vector<256x128xf32>
    %cst_7 = arith.constant 0.000000e+00 : f32
    %7 = vector.broadcast %cst_7 : f32 to vector<256x128xf32>
    %8 = arith.maximumf %6, %7 : vector<256x128xf32>
    %c0_8 = arith.constant 0 : index
    %c0_9 = arith.constant 0 : index
    %c0_10 = arith.constant 0 : index
    %c0_11 = arith.constant 0 : index
    %9 = vector.load %arg5[%c0_8, %c0_9, %c0_10, %c0_11] : memref<1x1x256x128xf32, #tpu.memory_space<vmem>>, vector<1x1x256x128xf32>
    %10 = vector.shape_cast %9 : vector<1x1x256x128xf32> to vector<256x128xf32>
    %11 = vector.shape_cast %8 : vector<256x128xf32> to vector<1x1x256x128xf32>
    tpu.vector_store %arg5[%c0_8, %c0_9, %c0_10, %c0_11], %11 {strides = array<i32>} : memref<1x1x256x128xf32, #tpu.memory_space<vmem>>, vector<1x1x256x128xf32>,
    return
  }
  func.func @transform_0(%arg0: i32, %arg1: i32) -> (i32, i32, i32, i32) {
    %c0_i32 = arith.constant 0 : i32
    %c0_i32_0 = arith.constant 0 : i32
    %c0_i32_1 = arith.constant 0 : i32
    return %arg0, %arg1, %c0_i32, %c0_i32_0 : i32, i32, i32, i32
  }
  func.func @transform_1(%arg0: i32, %arg1: i32) -> (i32, i32) {
    %c0_i32 = arith.constant 0 : i32
    %c0_i32_0 = arith.constant 0 : i32
    %c0_i32_1 = arith.constant 0 : i32
    return %c0_i32, %c0_i32_0 : i32, i32
  }
  func.func @transform_2(%arg0: i32, %arg1: i32) -> (i32, i32) {
    %c0_i32 = arith.constant 0 : i32
    %c0_i32_0 = arith.constant 0 : i32
    %c0_i32_1 = arith.constant 0 : i32
    return %c0_i32, %c0_i32_0 : i32, i32
  }
  func.func @transform_3(%arg0: i32, %arg1: i32) -> (i32, i32, i32, i32) {
    %c0_i32 = arith.constant 0 : i32
    %c0_i32_0 = arith.constant 0 : i32
    %c0_i32_1 = arith.constant 0 : i32
    return %arg0, %arg1, %c0_i32, %c0_i32_0 : i32, i32, i32, i32
  }
}

</mosaic_0001>

<llo_original>
// kernel: conv2d_bn_act.1
$region0: #{conv2d_bn_act.1}
  #allocation0 [shape = 'u32[]', space=smem, size = 0x4, offset = 0x4, fixed_abs, tag = 'smem constant byte address 0x4 - core index']
  #allocation1 [shape = 'u32[144,128]{1,0:T(1,128)}', space=vmem, size = 0x12000, scoped, tag = 'internal scratch']
  %s0 = inlined_call_operand.vmem [shape: bf16[2,1,256,36], index: 0, kind: input, shape index: {}]
  %s1 = inlined_call_operand.vmem [shape: bf16[36,128], index: 1, kind: input, shape index: {}]
  %s2 = inlined_call_operand.vmem [shape: f32[1,128], index: 2, kind: input, shape index: {}]
  %s3 = inlined_call_operand.vmem [shape: f32[2,1,256,128], index: 3, kind: output, shape index: {}]
  %s4 = sld [smem:[#allocation0]]
  $region45: #{conv2d_bn_act.1} parent=0
    _
  %s6 = ssub.s32 1, %s4
  %s7 = scalar_select 0, %s6, %s4
  loop: start=0, step=1, limit=4
  $region2: #{conv2d_bn_act.1} parent=0 // loop_pre_header
    _
  $region3: #{conv2d_bn_act.1} parent=0 // loop_header
    %s9 = sphi 0, %s13
    %p10 = scmp.ge.s32.totalorder %s9, 4
    %s16 = sphi 0, %s28
    %s17 = sphi 0, %s24
    %s18 = sphi 0, %s16
    %s19 = sphi 0, %s17
    %s20 = sphi 0, %s18
    %s21 = sphi 0, %s19
    %s33 = sphi 0, %s35
    %s36 = sphi 0, %s33
    %s37 = sphi 0, %s36
    %s53 = sphi 0, %s37
    %s57 = sphi 0, %s57
    %s59 = sphi 0, %s57
    %s60 = sphi 0, %s59
    %s74 = sphi 0, %s60
    %s78 = sphi 0, %s78
    %s80 = sphi 0, %s78
    %s81 = sphi 0, %s80
    %s95 = sphi 0, %s81
    %s103 = sphi 0, %s105
    %s106 = sphi 0, %s103
    %s107 = sphi 0, %s106
    %s123 = sphi 0, %s107
  $region4: #{conv2d_bn_act.1} parent=0 // loop_header_branch
    %12 = sbr.rel (%p10) target = $region8
  $region5: #{conv2d_bn_act.1} parent=0 // loop_body
    %s14 = ssub.s32 %s9, 1
    %s15 = ssub.s32 %s9, 2
    %s22 = sadd.s32 1, %s17
    %p23 = scmp.ge.s32.totalorder %s22, 1
    %s24 = scalar_select %p23, 0, %s22
    %s25 = sadd.s32 1, %s16
    %s26 = scalar_select %p23, %s25, %s16
    %p27 = scmp.ge.s32.totalorder %s26, 2
    %s28 = scalar_select %p27, 0, %s26
    %s29 = ssub.s32 %s16, %s28
    %s30 = ssub.s32 %s17, %s24
    %s31 = sor.u32 %s29, %s30
    %p32 = scmp.eq.s32.totalorder %s31, 0
    %s34 = sadd.s32 %s33, 1
    %s35 = scalar_select %p32, %s33, %s34
    %p38 = pneg %p32
    %p39 = scmp.eq.s32.totalorder %s9, 1
    %p40 = por %p38, %p39
    %p41 = scmp.ne.s32.totalorder %s33, %s36
    %p42 = scmp.eq.s32.totalorder %s9, 0
    %p43 = por %p41, %p42
    %p44 = scmp.ne.s32.totalorder %s33, %s36
    %p45 = scmp.eq.s32.totalorder %s14, 1
    %p46 = por %p44, %p45
    %p47 = scmp.ne.s32.totalorder %s36, %s37
    %p48 = scmp.eq.s32.totalorder %s14, 0
    %p49 = por %p47, %p48
    %p50 = scmp.ne.s32.totalorder %s36, %s37
    %p51 = scmp.eq.s32.totalorder %s15, 1
    %p52 = por %p50, %p51
    %p54 = scmp.ne.s32.totalorder %s37, %s53
    %p55 = scmp.eq.s32.totalorder %s15, 0
    %p56 = por %p54, %p55
    %s58 = sadd.s32 %s57, 1
    %p61 = scmp.eq.s32.totalorder %s9, 1
    %p62 = scmp.ne.s32.totalorder %s57, %s59
    %p63 = scmp.eq.s32.totalorder %s9, 0
    %p64 = por %p62, %p63
    %p65 = scmp.ne.s32.totalorder %s57, %s59
    %p66 = scmp.eq.s32.totalorder %s14, 1
    %p67 = por %p65, %p66
    %p68 = scmp.ne.s32.totalorder %s59, %s60
    %p69 = scmp.eq.s32.totalorder %s14, 0
    %p70 = por %p68, %p69
    %p71 = scmp.ne.s32.totalorder %s59, %s60
    %p72 = scmp.eq.s32.totalorder %s15, 1
    %p73 = por %p71, %p72
    %p75 = scmp.ne.s32.totalorder %s60, %s74
    %p76 = scmp.eq.s32.totalorder %s15, 0
    %p77 = por %p75, %p76
    %s79 = sadd.s32 %s78, 1
    %p82 = scmp.eq.s32.totalorder %s9, 1
    %p83 = scmp.ne.s32.totalorder %s78, %s80
    %p84 = scmp.eq.s32.totalorder %s9, 0
    %p85 = por %p83, %p84
    %p86 = scmp.ne.s32.totalorder %s78, %s80
    %p87 = scmp.eq.s32.totalorder %s14, 1
    %p88 = por %p86, %p87
    %p89 = scmp.ne.s32.totalorder %s80, %s81
    %p90 = scmp.eq.s32.totalorder %s14, 0
    %p91 = por %p89, %p90
    %p92 = scmp.ne.s32.totalorder %s80, %s81
    %p93 = scmp.eq.s32.totalorder %s15, 1
    %p94 = por %p92, %p93
    %p96 = scmp.ne.s32.totalorder %s81, %s95
    %p97 = scmp.eq.s32.totalorder %s15, 0
    %p98 = por %p96, %p97
    %s99 = ssub.s32 %s16, %s28
    %s100 = ssub.s32 %s17, %s24
    %s101 = sor.u32 %s99, %s100
    %p102 = scmp.eq.s32.totalorder %s101, 0
    %s104 = sadd.s32 %s103, 1
    %s105 = scalar_select %p102, %s103, %s104
    %p108 = pneg %p102
    %p109 = scmp.eq.s32.totalorder %s9, 1
    %p110 = por %p108, %p109
    %p111 = scmp.ne.s32.totalorder %s103, %s106
    %p112 = scmp.eq.s32.totalorder %s9, 0
    %p113 = por %p111, %p112
    %p114 = scmp.ne.s32.totalorder %s103, %s106
    %p115 = scmp.eq.s32.totalorder %s14, 1
    %p116 = por %p114, %p115
    %p117 = scmp.ne.s32.totalorder %s106, %s107
    %p118 = scmp.eq.s32.totalorder %s14, 0
    %p119 = por %p117, %p118
    %p120 = scmp.ne.s32.totalorder %s106, %s107
    %p121 = scmp.eq.s32.totalorder %s15, 1
    %p122 = por %p120, %p121
    %p124 = scmp.ne.s32.totalorder %s107, %s123
    %p125 = scmp.eq.s32.totalorder %s15, 0
    %p126 = por %p124, %p125
    %p127 = scmp.le.s32.totalorder 1, %s9
    %p128 = scmp.lt.s32.totalorder %s9, 3
    %p129 = pnand %p127, %p128
    %p130 = pneg %p129
    // Predicated region
    $region9: #{conv2d_bn_act.1} parent=5 // pred_check
      _
    $region10: #{conv2d_bn_act.1} parent=5 // pred_check_branch
      %132 = sbr.rel (%p129) target = $region12
    $region11: #{conv2d_bn_act.1} parent=5 // pred_region
      %s133 = ssub.s32 %s9, 1
      // Predicated region
      $region13: #{conv2d_bn_act.1} parent=11 // pred_check
        %p134 = pneg %p70
      $region14: #{conv2d_bn_act.1} parent=11 // pred_check_branch
        %136 = sbr.rel (%p134) target = $region16
      $region15: #{conv2d_bn_act.1} parent=11 // pred_region
        _
      $region16: #{conv2d_bn_act.1} parent=11 // pred_fallthru
        _
      // Predicated region
      $region17: #{conv2d_bn_act.1} parent=11 // pred_check
        %p137 = pneg %p91
      $region18: #{conv2d_bn_act.1} parent=11 // pred_check_branch
        %139 = sbr.rel (%p137) target = $region20
      $region19: #{conv2d_bn_act.1} parent=11 // pred_region
        _
      $region20: #{conv2d_bn_act.1} parent=11 // pred_fallthru
        _
    $region12: #{conv2d_bn_act.1} parent=5 // pred_fallthru
      _
    %p140 = scmp.lt.s32.totalorder %s9, 2
    // Predicated region
    $region21: #{conv2d_bn_act.1} parent=5 // pred_check
      %p141 = pneg %p140
    $region22: #{conv2d_bn_act.1} parent=5 // pred_check_branch
      %143 = sbr.rel (%p141) target = $region24
    $region23: #{conv2d_bn_act.1} parent=5 // pred_region
      // Predicated region
      $region25: #{conv2d_bn_act.1} parent=23 // pred_check
        %p144 = pneg %p43
      $region26: #{conv2d_bn_act.1} parent=23 // pred_check_branch
        %146 = sbr.rel (%p144) target = $region28
      $region27: #{conv2d_bn_act.1} parent=23 // pred_region
        %p147 = scmp.lt.s32.totalorder %s16, 1
        %s148 = scalar_select %p147, %s16, 1
        %p149 = scmp.lt.s32.totalorder %s17, 0
        %s150 = scalar_select %p149, %s17, 0
        %s151 = smul.addr %s150, 32
        %s152 = smul.addr %s148, 32
        %s153 = sadd.s32 %s151, %s152
        %s154 = smul.addr %s153, 4
        %s155 = scalar_lea.vmem %s0, %s154
      $region28: #{conv2d_bn_act.1} parent=23 // pred_fallthru
        _
    $region24: #{conv2d_bn_act.1} parent=5 // pred_fallthru
      _
    %p156 = scmp.le.s32.totalorder 1, %s9
    %p157 = scmp.lt.s32.totalorder %s9, 3
    %p158 = pnand %p156, %p157
    %p159 = pneg %p158
    // Predicated region
    $region29: #{conv2d_bn_act.1} parent=5 // pred_check
      _
    $region30: #{conv2d_bn_act.1} parent=5 // pred_check_branch
      %161 = sbr.rel (%p158) target = $region32
    $region31: #{conv2d_bn_act.1} parent=5 // pred_region
      %s162 = ssub.s32 %s9, 1
      %p163 = scmp.lt.s32.totalorder %s18, 1
      %s164 = scalar_select %p163, %s18, 1
      %p165 = scmp.lt.s32.totalorder %s19, 0
      %s166 = scalar_select %p165, %s19, 0
      %s167 = smul.addr %s166, 32
      %s168 = smul.addr %s164, 32
      %s169 = sadd.s32 %s167, %s168
      %s170 = smul.addr %s169, 4
      %s171 = scalar_lea.vmem %s0, %s170
      %p172 = pneg %p49
      %p173 = pneg %p46
      %p174 = pneg %p70
      %p175 = pneg %p67
      %p176 = pneg %p91
      %p177 = pneg %p88
      %p178 = pneg %p119
      %p179 = pneg %p116
      %p180 = scmp.lt.s32.totalorder %s18, 1
      %s181 = scalar_select %p180, %s18, 1
      %p182 = scmp.lt.s32.totalorder %s19, 0
      %s183 = scalar_select %p182, %s19, 0
      %s184 = smul.addr %s183, 32
      %s185 = smul.addr %s181, 32
      %s186 = sadd.s32 %s184, %s185
      %s187 = smul.addr %s186, 8
      %s188 = scalar_lea.vmem %s3, %s187
      %p189 = scmp.lt.s32.totalorder %s18, 1
      %s190 = scalar_select %p189, %s18, 1
      %p191 = scmp.lt.s32.totalorder %s19, 0
      %s192 = scalar_select %p191, %s19, 0
      %s193 = smul.addr %s192, 32
      %s194 = smul.addr %s190, 32
      %s195 = sadd.s32 %s193, %s194
      %s196 = smul.addr %s195, 4
      %s197 = scalar_lea.vmem %s0, %s196
      %p198 = scmp.lt.s32.totalorder %s18, 1
      %s199 = scalar_select %p198, %s18, 1
      %p200 = scmp.lt.s32.totalorder %s19, 0
      %s201 = scalar_select %p200, %s19, 0
      %s202 = smul.addr %s201, 32
      %s203 = smul.addr %s199, 32
      %s204 = sadd.s32 %s202, %s203
      %s205 = smul.addr %s204, 8
      %s206 = scalar_lea.vmem %s3, %s205
      %v208 = vld [vmem:[%s197] sm:$0xf]
      %v209 = vld [vmem:[%s197 + $0x4] sm:$0xf]
      %v210 = vld [vmem:[%s197 + $0x8] sm:$0xf]
      %v211 = vld [vmem:[%s197 + $0xc] sm:$0xf]
      %v212 = vld [vmem:[%s197 + $0x10] sm:$0xf]
      %v213 = vld [vmem:[%s197 + $0x14] sm:$0xf]
      %v214 = vld [vmem:[%s197 + $0x18] sm:$0xf]
      %v215 = vld [vmem:[%s197 + $0x1c] sm:$0xf]
      %v216 = vld [vmem:[%s197 + $0x20] sm:$0xf]
      %v217 = vld [vmem:[%s197 + $0x24] sm:$0xf]
      %v218 = vld [vmem:[%s197 + $0x28] sm:$0xf]
      %v219 = vld [vmem:[%s197 + $0x2c] sm:$0xf]
      %v220 = vld [vmem:[%s197 + $0x30] sm:$0xf]
      %v221 = vld [vmem:[%s197 + $0x34] sm:$0xf]
      %v222 = vld [vmem:[%s197 + $0x38] sm:$0xf]
      %v223 = vld [vmem:[%s197 + $0x3c] sm:$0xf]
      %v224 = vld [vmem:[%s197 + $0x40] sm:$0xf]
      %v225 = vld [vmem:[%s197 + $0x44] sm:$0xf]
      %v226 = vld [vmem:[%s197 + $0x48] sm:$0xf]
      %v227 = vld [vmem:[%s197 + $0x4c] sm:$0xf]
      %v228 = vld [vmem:[%s197 + $0x50] sm:$0xf]
      %v229 = vld [vmem:[%s197 + $0x54] sm:$0xf]
      %v230 = vld [vmem:[%s197 + $0x58] sm:$0xf]
      %v231 = vld [vmem:[%s197 + $0x5c] sm:$0xf]
      %v232 = vld [vmem:[%s197 + $0x60] sm:$0xf]
      %v233 = vld [vmem:[%s197 + $0x64] sm:$0xf]
      %v234 = vld [vmem:[%s197 + $0x68] sm:$0xf]
      %v235 = vld [vmem:[%s197 + $0x6c] sm:$0xf]
      %v236 = vld [vmem:[%s197 + $0x70] sm:$0xf]
      %v237 = vld [vmem:[%s197 + $0x74] sm:$0xf]
      %v238 = vld [vmem:[%s197 + $0x78] sm:$0xf]
      %v239 = vld [vmem:[%s197 + $0x7c] sm:$0xf]
      %v240 = vld [vmem:[%s1] sm:$0xf]
      %v241 = vld [vmem:[%s1 + $0x4] sm:$0xf]
      %v242 = vld [vmem:[%s1 + $0x8] sm:$0xf]
      %v243 = vld [vmem:[%s1 + $0xc] sm:$0xf]
      %v244 = vld [vmem:[%s1 + $0x10] sm:$0x3]
      %v245 = vld [vmem:[%s2] sm:$0x1]
      %v247 = vlaneseq
      %v248 = vshrl.u32 %v247, 7
      %v249 = vsub.s32 0, %v248
      %v250 = vrot.slane %v245, %v249
      %v284 = vunpack.c.l.b16 %v208
      %v285 = vunpack.c.l.b16 %v209
      %v286 = vunpack.c.l.b16 %v210
      %v287 = vunpack.c.l.b16 %v211
      %v288 = vunpack.c.l.b16 %v212
      %v289 = vunpack.c.l.b16 %v213
      %v290 = vunpack.c.l.b16 %v214
      %v291 = vunpack.c.l.b16 %v215
      %v292 = vunpack.c.l.b16 %v216
      %v293 = vunpack.c.l.b16 %v217
      %v294 = vunpack.c.l.b16 %v218
      %v295 = vunpack.c.l.b16 %v219
      %v296 = vunpack.c.l.b16 %v220
      %v297 = vunpack.c.l.b16 %v221
      %v298 = vunpack.c.l.b16 %v222
      %v299 = vunpack.c.l.b16 %v223
      %v300 = vunpack.c.l.b16 %v224
      %v301 = vunpack.c.l.b16 %v225
      %v302 = vunpack.c.l.b16 %v226
      %v303 = vunpack.c.l.b16 %v227
      %v304 = vunpack.c.l.b16 %v228
      %v305 = vunpack.c.l.b16 %v229
      %v306 = vunpack.c.l.b16 %v230
      %v307 = vunpack.c.l.b16 %v231
      %v308 = vunpack.c.l.b16 %v232
      %v309 = vunpack.c.l.b16 %v233
      %v310 = vunpack.c.l.b16 %v234
      %v311 = vunpack.c.l.b16 %v235
      %v312 = vunpack.c.l.b16 %v236
      %v313 = vunpack.c.l.b16 %v237
      %v314 = vunpack.c.l.b16 %v238
      %v315 = vunpack.c.l.b16 %v239
      %v316 = vpack.c.b16 %v285, %v284
      %v317 = vpack.c.b16 %v287, %v286
      %v318 = vpack.c.b16 %v289, %v288
      %v319 = vpack.c.b16 %v291, %v290
      %v320 = vpack.c.b16 %v293, %v292
      %v321 = vpack.c.b16 %v295, %v294
      %v322 = vpack.c.b16 %v297, %v296
      %v323 = vpack.c.b16 %v299, %v298
      %v324 = vpack.c.b16 %v301, %v300
      %v325 = vpack.c.b16 %v303, %v302
      %v326 = vpack.c.b16 %v305, %v304
      %v327 = vpack.c.b16 %v307, %v306
      %v328 = vpack.c.b16 %v309, %v308
      %v329 = vpack.c.b16 %v311, %v310
      %v330 = vpack.c.b16 %v313, %v312
      %v331 = vpack.c.b16 %v315, %v314
      %v337 = vunpack.c.l.b16 %v240
      %v338 = vunpack.c.l.b16 %v241
      %v339 = vunpack.c.l.b16 %v242
      %v340 = vunpack.c.l.b16 %v243
      %v341 = vunpack.c.l.b16 %v244
      %v342 = vpack.c.b16 %v338, %v337
      %v343 = vpack.c.b16 %v340, %v339
      %v344 = vpack.c.b16 %v341, %v341
      %vm347 = vcmask 293888
      %v349 = vsel %vm347, %v316, 0
      %v352 = vsel %vm347, %v317, 0
      %v355 = vsel %vm347, %v318, 0
      %v358 = vsel %vm347, %v319, 0
      %v361 = vsel %vm347, %v320, 0
      %v364 = vsel %vm347, %v321, 0
      %v367 = vsel %vm347, %v322, 0
      %v370 = vsel %vm347, %v323, 0
      %v373 = vsel %vm347, %v324, 0
      %v376 = vsel %vm347, %v325, 0
      %v379 = vsel %vm347, %v326, 0
      %v382 = vsel %vm347, %v327, 0
      %v385 = vsel %vm347, %v328, 0
      %v388 = vsel %vm347, %v329, 0
      %v391 = vsel %vm347, %v330, 0
      %v394 = vsel %vm347, %v331, 0
      %vm396 = vcmask 1041408
      %v398 = vsel %vm396, %v344, 0
      %400 = vmatprep.subr.bf16.mxu0 0
      %401 = vmatpush1.bf16.msra.mxu0 %v342
      %402 = vmatprep.subr.bf16.mxu0 0
      %403 = vmatpush1.bf16.msra.mxu0 %v343
      %404 = vmatprep.subr.bf16.mxu0 0
      %405 = vmatpush1.bf16.msra.mxu0 %v398
      %406 = vmatprep.subr.bf16.mxu0 0
      %407 = vmatpush1.bf16.msra.mxu0 0
      %408 = vmatprep.subr.bf16.mxu0 0
      %409 = vmatpush1.bf16.msra.mxu0 0
      %410 = vmatprep.subr.bf16.mxu0 0
      %411 = vmatpush1.bf16.msra.mxu0 0
      %412 = vmatprep.subr.bf16.mxu0 0
      %413 = vmatpush1.bf16.msra.mxu0 0
      %414 = vmatprep.subr.bf16.mxu0 0
      %415 = vmatpush1.bf16.msra.mxu0 0
      %416 = vmatprep.subr.bf16.mxu0 0
      %417 = vmatpush1.bf16.msra.mxu0 0
      %418 = vmatprep.subr.bf16.mxu0 0
      %419 = vmatpush1.bf16.msra.mxu0 0
      %420 = vmatprep.subr.bf16.mxu0 0
      %421 = vmatpush1.bf16.msra.mxu0 0
      %422 = vmatprep.subr.bf16.mxu0 0
      %423 = vmatpush1.bf16.msra.mxu0 0
      %424 = vmatprep.subr.bf16.mxu0 0
      %425 = vmatpush1.bf16.msra.mxu0 0
      %426 = vmatprep.subr.bf16.mxu0 0
      %427 = vmatpush1.bf16.msra.mxu0 0
      %428 = vmatprep.subr.bf16.mxu0 0
      %429 = vmatpush1.bf16.msra.mxu0 0
      %430 = vmatprep.subr.bf16.mxu0 0
      %431 = vmatpush1.bf16.msra.mxu0 0
      %432 = vmatprep.mubr.bf16.mxu0 0
      %433 = vmatmul.mubr.bf16.gmra.mrb[0].mxu0 %v349
      %v434 = vpop.f32.mrb[0].mxu0
      %v435 = vadd.f32 %v250, %v434
      %v436 = vpop.f32.mrb[0].mxu0
      %v437 = vpop.f32.mrb[0].mxu0
      %v438 = vadd.f32 %v250, %v437
      %v439 = vpop.f32.mrb[0].mxu0
      %440 = vmatprep.mubr.bf16.mxu0 0
      %441 = vmatmul.mubr.bf16.gmra.mrb[0].mxu0 %v352
      %v442 = vpop.f32.mrb[0].mxu0
      %v443 = vadd.f32 %v250, %v442
      %v444 = vpop.f32.mrb[0].mxu0
      %v445 = vpop.f32.mrb[0].mxu0
      %v446 = vadd.f32 %v250, %v445
      %v447 = vpop.f32.mrb[0].mxu0
      %448 = vmatprep.mubr.bf16.mxu0 0
      %449 = vmatmul.mubr.bf16.gmra.mrb[0].mxu0 %v355
      %v450 = vpop.f32.mrb[0].mxu0
      %v451 = vadd.f32 %v250, %v450
      %v452 = vpop.f32.mrb[0].mxu0
      %v453 = vpop.f32.mrb[0].mxu0
      %v454 = vadd.f32 %v250, %v453
      %v455 = vpop.f32.mrb[0].mxu0
      %456 = vmatprep.mubr.bf16.mxu0 0
      %457 = vmatmul.mubr.bf16.gmra.mrb[0].mxu0 %v358
      %v458 = vpop.f32.mrb[0].mxu0
      %v459 = vadd.f32 %v250, %v458
      %v460 = vpop.f32.mrb[0].mxu0
      %v461 = vpop.f32.mrb[0].mxu0
      %v462 = vadd.f32 %v250, %v461
      %v463 = vpop.f32.mrb[0].mxu0
      %464 = vmatprep.mubr.bf16.mxu0 0
      %465 = vmatmul.mubr.bf16.gmra.mrb[0].mxu0 %v361
      %v466 = vpop.f32.mrb[0].mxu0
      %v467 = vadd.f32 %v250, %v466
      %v468 = vpop.f32.mrb[0].mxu0
      %v469 = vpop.f32.mrb[0].mxu0
      %v470 = vadd.f32 %v250, %v469
      %v471 = vpop.f32.mrb[0].mxu0
      %472 = vmatprep.mubr.bf16.mxu0 0
      %473 = vmatmul.mubr.bf16.gmra.mrb[0].mxu0 %v364
      %v474 = vpop.f32.mrb[0].mxu0
      %v475 = vadd.f32 %v250, %v474
      %v476 = vpop.f32.mrb[0].mxu0
      %v477 = vpop.f32.mrb[0].mxu0
      %v478 = vadd.f32 %v250, %v477
      %v479 = vpop.f32.mrb[0].mxu0
      %480 = vmatprep.mubr.bf16.mxu0 0
      %481 = vmatmul.mubr.bf16.gmra.mrb[0].mxu0 %v367
      %v482 = vpop.f32.mrb[0].mxu0
      %v483 = vadd.f32 %v250, %v482
      %v484 = vpop.f32.mrb[0].mxu0
      %v485 = vpop.f32.mrb[0].mxu0
      %v486 = vadd.f32 %v250, %v485
      %v487 = vpop.f32.mrb[0].mxu0
      %488 = vmatprep.mubr.bf16.mxu0 0
      %489 = vmatmul.mubr.bf16.gmra.mrb[0].mxu0 %v370
      %v490 = vpop.f32.mrb[0].mxu0
      %v491 = vadd.f32 %v250, %v490
      %v492 = vpop.f32.mrb[0].mxu0
      %v493 = vpop.f32.mrb[0].mxu0
      %v494 = vadd.f32 %v250, %v493
      %v495 = vpop.f32.mrb[0].mxu0
      %496 = vmatprep.mubr.bf16.mxu0 0
      %497 = vmatmul.mubr.bf16.gmra.mrb[0].mxu0 %v373
      %v498 = vpop.f32.mrb[0].mxu0
      %v499 = vadd.f32 %v250, %v498
      %v500 = vpop.f32.mrb[0].mxu0
      %v501 = vpop.f32.mrb[0].mxu0
      %v502 = vadd.f32 %v250, %v501
      %v503 = vpop.f32.mrb[0].mxu0
      %504 = vmatprep.mubr.bf16.mxu0 0
      %505 = vmatmul.mubr.bf16.gmra.mrb[0].mxu0 %v376
      %v506 = vpop.f32.mrb[0].mxu0
      %v507 = vadd.f32 %v250, %v506
      %v508 = vpop.f32.mrb[0].mxu0
      %v509 = vpop.f32.mrb[0].mxu0
      %v510 = vadd.f32 %v250, %v509
      %v511 = vpop.f32.mrb[0].mxu0
      %512 = vmatprep.mubr.bf16.mxu0 0
      %513 = vmatmul.mubr.bf16.gmra.mrb[0].mxu0 %v379
      %v514 = vpop.f32.mrb[0].mxu0
      %v515 = vadd.f32 %v250, %v514
      %v516 = vpop.f32.mrb[0].mxu0
      %v517 = vpop.f32.mrb[0].mxu0
      %v518 = vadd.f32 %v250, %v517
      %v519 = vpop.f32.mrb[0].mxu0
      %520 = vmatprep.mubr.bf16.mxu0 0
      %521 = vmatmul.mubr.bf16.gmra.mrb[0].mxu0 %v382
      %v522 = vpop.f32.mrb[0].mxu0
      %v523 = vadd.f32 %v250, %v522
      %v524 = vpop.f32.mrb[0].mxu0
      %v525 = vpop.f32.mrb[0].mxu0
      %v526 = vadd.f32 %v250, %v525
      %v527 = vpop.f32.mrb[0].mxu0
      %528 = vmatprep.mubr.bf16.mxu0 0
      %529 = vmatmul.mubr.bf16.gmra.mrb[0].mxu0 %v385
      %v530 = vpop.f32.mrb[0].mxu0
      %v531 = vadd.f32 %v250, %v530
      %v532 = vpop.f32.mrb[0].mxu0
      %v533 = vpop.f32.mrb[0].mxu0
      %v534 = vadd.f32 %v250, %v533
      %v535 = vpop.f32.mrb[0].mxu0
      %536 = vmatprep.mubr.bf16.mxu0 0
      %537 = vmatmul.mubr.bf16.gmra.mrb[0].mxu0 %v388
      %v538 = vpop.f32.mrb[0].mxu0
      %v539 = vadd.f32 %v250, %v538
      %v540 = vpop.f32.mrb[0].mxu0
      %v541 = vpop.f32.mrb[0].mxu0
      %v542 = vadd.f32 %v250, %v541
      %v543 = vpop.f32.mrb[0].mxu0
      %544 = vmatprep.mubr.bf16.mxu0 0
      %545 = vmatmul.mubr.bf16.gmra.mrb[0].mxu0 %v391
      %v546 = vpop.f32.mrb[0].mxu0
      %v547 = vadd.f32 %v250, %v546
      %v548 = vpop.f32.mrb[0].mxu0
      %v549 = vpop.f32.mrb[0].mxu0
      %v550 = vadd.f32 %v250, %v549
      %v551 = vpop.f32.mrb[0].mxu0
      %552 = vmatprep.mubr.bf16.mxu0 0
      %553 = vmatmul.mubr.bf16.gmra.mrb[0].mxu0 %v394
      %v554 = vpop.f32.mrb[0].mxu0
      %v555 = vadd.f32 %v250, %v554
      %v556 = vpop.f32.mrb[0].mxu0
      %v557 = vpop.f32.mrb[0].mxu0
      %v558 = vadd.f32 %v250, %v557
      %v559 = vpop.f32.mrb[0].mxu0
      %560 = vdwg.mxu0
      %v561 = vmax.f32 %v435, 0.0
      %v562 = vmax.f32 %v438, 0.0
      %v563 = vmax.f32 %v443, 0.0
      %v564 = vmax.f32 %v446, 0.0
      %v565 = vmax.f32 %v451, 0.0
      %v566 = vmax.f32 %v454, 0.0
      %v567 = vmax.f32 %v459, 0.0
      %v568 = vmax.f32 %v462, 0.0
      %v569 = vmax.f32 %v467, 0.0
      %v570 = vmax.f32 %v470, 0.0
      %v571 = vmax.f32 %v475, 0.0
      %v572 = vmax.f32 %v478, 0.0
      %v573 = vmax.f32 %v483, 0.0
      %v574 = vmax.f32 %v486, 0.0
      %v575 = vmax.f32 %v491, 0.0
      %v576 = vmax.f32 %v494, 0.0
      %v577 = vmax.f32 %v499, 0.0
      %v578 = vmax.f32 %v502, 0.0
      %v579 = vmax.f32 %v507, 0.0
      %v580 = vmax.f32 %v510, 0.0
      %v581 = vmax.f32 %v515, 0.0
      %v582 = vmax.f32 %v518, 0.0
      %v583 = vmax.f32 %v523, 0.0
      %v584 = vmax.f32 %v526, 0.0
      %v585 = vmax.f32 %v531, 0.0
      %v586 = vmax.f32 %v534, 0.0
      %v587 = vmax.f32 %v539, 0.0
      %v588 = vmax.f32 %v542, 0.0
      %v589 = vmax.f32 %v547, 0.0
      %v590 = vmax.f32 %v550, 0.0
      %v591 = vmax.f32 %v555, 0.0
      %v592 = vmax.f32 %v558, 0.0
      %593 = vst [vmem:[%s206] sm:$0xff] %v561
      %594 = vst [vmem:[%s206 + $0x8] sm:$0xff] %v562
      %595 = vst [vmem:[%s206 + $0x10] sm:$0xff] %v563
      %596 = vst [vmem:[%s206 + $0x18] sm:$0xff] %v564
      %597 = vst [vmem:[%s206 + $0x20] sm:$0xff] %v565
      %598 = vst [vmem:[%s206 + $0x28] sm:$0xff] %v566
      %599 = vst [vmem:[%s206 + $0x30] sm:$0xff] %v567
      %600 = vst [vmem:[%s206 + $0x38] sm:$0xff] %v568
      %601 = vst [vmem:[%s206 + $0x40] sm:$0xff] %v569
      %602 = vst [vmem:[%s206 + $0x48] sm:$0xff] %v570
      %603 = vst [vmem:[%s206 + $0x50] sm:$0xff] %v571
      %604 = vst [vmem:[%s206 + $0x58] sm:$0xff] %v572
      %605 = vst [vmem:[%s206 + $0x60] sm:$0xff] %v573
      %606 = vst [vmem:[%s206 + $0x68] sm:$0xff] %v574
      %607 = vst [vmem:[%s206 + $0x70] sm:$0xff] %v575
      %608 = vst [vmem:[%s206 + $0x78] sm:$0xff] %v576
      %609 = vst [vmem:[%s206 + $0x80] sm:$0xff] %v577
      %610 = vst [vmem:[%s206 + $0x88] sm:$0xff] %v578
      %611 = vst [vmem:[%s206 + $0x90] sm:$0xff] %v579
      %612 = vst [vmem:[%s206 + $0x98] sm:$0xff] %v580
      %613 = vst [vmem:[%s206 + $0xa0] sm:$0xff] %v581
      %614 = vst [vmem:[%s206 + $0xa8] sm:$0xff] %v582
      %615 = vst [vmem:[%s206 + $0xb0] sm:$0xff] %v583
      %616 = vst [vmem:[%s206 + $0xb8] sm:$0xff] %v584
      %617 = vst [vmem:[%s206 + $0xc0] sm:$0xff] %v585
      %618 = vst [vmem:[%s206 + $0xc8] sm:$0xff] %v586
      %619 = vst [vmem:[%s206 + $0xd0] sm:$0xff] %v587
      %620 = vst [vmem:[%s206 + $0xd8] sm:$0xff] %v588
      %621 = vst [vmem:[%s206 + $0xe0] sm:$0xff] %v589
      %622 = vst [vmem:[%s206 + $0xe8] sm:$0xff] %v590
      %623 = vst [vmem:[%s206 + $0xf0] sm:$0xff] %v591
      %624 = vst [vmem:[%s206 + $0xf8] sm:$0xff] %v592
      %p625 = scmp.lt.s32.totalorder %s18, 1
      %s626 = scalar_select %p625, %s18, 1
      %p627 = scmp.lt.s32.totalorder %s19, 0
      %s628 = scalar_select %p627, %s19, 0
      %s629 = smul.addr %s628, 32
      %s630 = smul.addr %s626, 32
      %s631 = sadd.s32 %s629, %s630
      %s632 = smul.addr %s631, 8
      %s633 = scalar_lea.vmem %s3, %s632
      // Predicated region
      $region33: #{conv2d_bn_act.1} parent=31 // pred_check
        %p634 = pneg %p116
      $region34: #{conv2d_bn_act.1} parent=31 // pred_check_branch
        %636 = sbr.rel (%p634) target = $region36
      $region35: #{conv2d_bn_act.1} parent=31 // pred_region
        _
      $region36: #{conv2d_bn_act.1} parent=31 // pred_fallthru
        _
    $region32: #{conv2d_bn_act.1} parent=5 // pred_fallthru
      _
    %p637 = scmp.le.s32.totalorder 2, %s9
    // Predicated region
    $region37: #{conv2d_bn_act.1} parent=5 // pred_check
      %p638 = pneg %p637
    $region38: #{conv2d_bn_act.1} parent=5 // pred_check_branch
      %640 = sbr.rel (%p638) target = $region40
    $region39: #{conv2d_bn_act.1} parent=5 // pred_region
      %s641 = ssub.s32 %s9, 2
      // Predicated region
      $region41: #{conv2d_bn_act.1} parent=39 // pred_check
        %p642 = pneg %p122
      $region42: #{conv2d_bn_act.1} parent=39 // pred_check_branch
        %644 = sbr.rel (%p642) target = $region44
      $region43: #{conv2d_bn_act.1} parent=39 // pred_region
        %p645 = scmp.lt.s32.totalorder %s20, 1
        %s646 = scalar_select %p645, %s20, 1
        %p647 = scmp.lt.s32.totalorder %s21, 0
        %s648 = scalar_select %p647, %s21, 0
        %s649 = smul.addr %s648, 32
        %s650 = smul.addr %s646, 32
        %s651 = sadd.s32 %s649, %s650
        %s652 = smul.addr %s651, 8
        %s653 = scalar_lea.vmem %s3, %s652
      $region44: #{conv2d_bn_act.1} parent=39 // pred_fallthru
        _
    $region40: #{conv2d_bn_act.1} parent=5 // pred_fallthru
      _
  $region6: #{conv2d_bn_act.1} parent=0 // loop_footer
    %s13 = sadd.s32 1, %s9
  $region7: #{conv2d_bn_act.1} parent=0 // loop_footer_branch
    %8 = sbr.rel target = $region3
  $region8: #{conv2d_bn_act.1} parent=0 // loop_exit
    _

</llo_original>
